<compile_context>
chip_gen: v7x
topology: tpu7x:2x2x1
jax: 0.10.0
libtpu: 0.0.40
codegen_flags: <defaults>
</compile_context>

<pallas_src>
import jax
import jax.numpy as jnp
import numpy as np
from jax.experimental import pallas as pl
from jax.experimental.pallas import tpu as pltpu

TAU = 0.07
_EPS2 = 1e-24     # F.normalize(eps=1e-12) applied to the squared norm
_NEG_BIG = -1e30  # exp(_NEG_BIG) == 0.0 in f32


# ----------------------------- Fused kernel: normalize gathered rows + contrastive loss
def _make_contrast_kernel(tau, S, S_pad):
    inv_tau = 1.0 / tau

    def kernel(c_ref, p_ref, o_ref):
        # c_ref: (block_b, S_pad, C_pad)     raw gathered anchors   (zero padded)
        # p_ref: (block_b, P, S_pad, C_pad)  raw gathered positives (zero padded)
        c = c_ref[...]
        c = c * jax.lax.rsqrt(
            jnp.maximum(jnp.sum(c * c, axis=-1, keepdims=True), _EPS2))

        # Single fused normalization pass over ALL P positives, then sum over P:
        # sum_k cos(c_s, p_{k,s}) == <c_s, sum_k normalize(p_{k,s})>.
        p = p_ref[...]
        p = p * jax.lax.rsqrt(
            jnp.maximum(jnp.sum(p * p, axis=-1, keepdims=True), _EPS2))
        psum = jnp.sum(p, axis=1)                                     # (bb, S_pad, C_pad)

        pos_logit = jnp.sum(c * psum, axis=-1) * inv_tau              # (bb, S_pad)
        pos = jnp.exp(pos_logit)

        # Anchor-anchor similarity on the MXU (f32 accumulation, K = C_pad = 128k).
        sim = jnp.einsum('bic,bjc->bij', c, c,
                         preferred_element_type=jnp.float32)          # (bb, S_pad, S_pad)
        logits = sim * inv_tau
        ii = jax.lax.broadcasted_iota(jnp.int32, (S_pad, S_pad), 0)
        jj = jax.lax.broadcasted_iota(jnp.int32, (S_pad, S_pad), 1)
        # Mask diagonal + padded-j columns BEFORE the exp: masked entries exp to
        # exactly 0, so they drop out of the negative sum.  Mathematically equal
        # to torch's matrix.sum(0) - diagonal(matrix), better conditioned in f32.
        keep = (ii != jj) & (jj < S)
        logits = jnp.where(keep[None, :, :], logits, _NEG_BIG)
        neg = jnp.sum(jnp.exp(logits), axis=2)                        # (bb, S_pad)

        # -log(pos / (pos + neg + 1e-8)) == log(pos + neg + 1e-8) - pos_logit
        loss_bs = jnp.log(pos + neg + 1e-8) - pos_logit               # (bb, S_pad)
        row_keep = jax.lax.broadcasted_iota(jnp.int32, loss_bs.shape, 1) < S
        loss_bs = jnp.where(row_keep, loss_bs, 0.0)                   # drop padded rows
        per_b = jnp.sum(loss_bs, axis=-1, keepdims=True) * (1.0 / S)  # per-image mean (bb, 1)
        blk = jnp.sum(per_b, axis=0, keepdims=True)                   # (1, 1) block partial sum
        o_ref[0] = blk

    return kernel


def contrast_loss_pallas(c_sel, p_sel, tau):
    """c_sel: (B, S, C) raw gathered anchors; p_sel: (B, P, S, C) raw positives."""
    B, S, C = c_sel.shape
    P = p_sel.shape[1]

    # Lane / sublane alignment done in the wrapper.  Zero channel padding is
    # exact; padded sample rows are masked inside the kernel.
    S_pad = -(-S // 8) * 8
    C_pad = -(-C // 128) * 128
    c_pad = jnp.pad(c_sel.astype(jnp.float32),
                    ((0, 0), (0, S_pad - S), (0, C_pad - C)))
    p_pad = jnp.pad(p_sel.astype(jnp.float32),
                    ((0, 0), (0, 0), (0, S_pad - S), (0, C_pad - C)))

    # Two batch blocks -> both TensorCores on v7x; harmless on v5e/v6e (1 TC).
    num_blocks = 2 if (B % 2 == 0 and B >= 2) else 1
    block_b = B // num_blocks

    cost = pl.CostEstimate(
        flops=int(2 * B * S_pad * S_pad * C_pad + 4 * B * (P + 1) * S_pad * C_pad),
        transcendentals=int(B * S_pad * S_pad + 3 * B * S_pad + B * (P + 1) * S_pad),
        bytes_accessed=int(4 * (B * (P + 2) * S_pad * C_pad + num_blocks)),
    )

    partial = pl.pallas_call(
        _make_contrast_kernel(tau, S, S_pad),
        out_shape=jax.ShapeDtypeStruct((num_blocks, 1, 1), jnp.float32),
        grid=(num_blocks,),
        in_specs=[
            pl.BlockSpec((block_b, S_pad, C_pad), lambda i: (i, 0, 0),
                         memory_space=pltpu.MemorySpace.VMEM),
            pl.BlockSpec((block_b, P, S_pad, C_pad), lambda i: (i, 0, 0, 0),
                         memory_space=pltpu.MemorySpace.VMEM),
        ],
        out_specs=pl.BlockSpec((1, 1, 1), lambda i: (i, 0, 0),
                               memory_space=pltpu.MemorySpace.VMEM),
        compiler_params=pltpu.CompilerParams(dimension_semantics=("parallel",)),
        cost_estimate=cost,
    )(c_pad, p_pad)
    return jnp.sum(partial) / B


# ----------------------------- Glue: sampling / gather (mirrors torch nonzero+randperm)
def _sample_indices(mask_flat, key, sample_num):
    B, HW = mask_flat.shape
    hard_n = sample_num // 2
    easy_n = sample_num - hard_n
    # TODO(synk): torch clamps hard_n/easy_n to the number of available pixels
    # (data-dependent shapes); statically-shaped JAX assumes >= hard_n zeros and
    # >= easy_n ones per image (enforced when constructing the test mask).
    u = jax.random.uniform(key, (B, HW))
    easy_scores = jnp.where(mask_flat > 0.5, u, -1.0)
    hard_scores = jnp.where(mask_flat > 0.5, -1.0, u)
    hard_idx = jax.lax.top_k(hard_scores, hard_n)[1]  # random subset of hard pixels
    easy_idx = jax.lax.top_k(easy_scores, easy_n)[1]  # random subset of easy pixels
    return jnp.concatenate([hard_idx, easy_idx], axis=1)  # (B, S)


def _gather_samples(proj_list, idx, mask, key, sample_num):
    """Gather only the sampled pixel embeddings, channels-last, UNnormalized.

    L2 normalization commutes with row gather, so deferring it to the kernel is
    mathematically identical to torch's normalize-everything-then-index while
    touching only B*S*(P+1) rows.  The gather itself is a one-hot MXU matmul:
    XLA lowers a minor-axis (HW) gather + transpose on NCHW poorly on TPU.
    """
    N = len(proj_list)
    B, C, H, W = proj_list[0].shape
    HW = H * W
    indices = _sample_indices(mask.reshape(B, HW), key, sample_num)       # (B, S)
    onehot = jax.nn.one_hot(indices, HW, dtype=jnp.float32)               # (B, S, HW)
    flat = jnp.stack([p.reshape(B, C, HW) for p in proj_list], axis=0)    # (N, B, C, HW)
    sel = jnp.einsum('bsh,nbch->nbsc', onehot, flat.astype(jnp.float32))  # (N, B, S, C)
    c_sel = sel[idx]                                                       # (B, S, C)
    p_sel = jnp.stack([sel[i] for i in range(N) if i != idx], axis=1)      # (B, P, S, C)
    return c_sel, p_sel


def contrast1_forward(proj_list, idx, pseudo_label, mask, key, tau=TAU, sample_num=5):
    del pseudo_label  # unused in the original torch forward as well
    c_sel, p_sel = _gather_samples(proj_list, idx, mask, key, sample_num)
    return contrast_loss_pallas(c_sel, p_sel, tau)


# ----------------------------- Pure-JAX reference (same sampling) for verification
def contrast1_reference(proj_list, idx, pseudo_label, mask, key, tau=TAU, sample_num=5):
    del pseudo_label
    c_raw, p_raw = _gather_samples(proj_list, idx, mask, key, sample_num)

    def norm(x):  # F.normalize(dim=-1, eps=1e-12)
        n = jnp.sqrt(jnp.sum(x * x, axis=-1, keepdims=True))
        return x / jnp.maximum(n, 1e-12)

    c = norm(c_raw)                                                   # (B, S, C)
    p = norm(p_raw)                                                   # (B, P, S, C)
    pos = jnp.exp(jnp.einsum('bsc,bpsc->bs', c, p) / tau)
    sim = jnp.einsum('bic,bjc->bij', c, c)
    S = sim.shape[-1]
    offdiag = ~jnp.eye(S, dtype=bool)[None]
    # == matrix.sum(dim=0) - diagonal(matrix), better conditioned in fp32.
    neg = jnp.sum(jnp.where(offdiag, jnp.exp(sim / tau), 0.0), axis=2)
    per_b = jnp.mean(-jnp.log(pos / (pos + neg + 1e-8)), axis=-1)
    return jnp.mean(per_b)


if __name__ == "__main__":
    key = jax.random.PRNGKey(0)
    B, C, H, W, N = 2, 32, 16, 16, 3
    ks = jax.random.split(key, N + 3)
    proj_list = [jax.random.normal(ks[i], (B, C, H, W), dtype=jnp.float32)
                 for i in range(N)]
    pseudo_label = jax.random.randint(ks[N], (B, H, W), 0, 4)
    mask = jax.random.bernoulli(ks[N + 1], 0.5, (B, H, W)).astype(jnp.float32)
    # guarantee at least 3 "easy" (mask==1) and 2 "hard" (mask==0) pixels per image
    mask = mask.at[:, 0, :4].set(1.0).at[:, 0, 4:8].set(0.0)
    sample_key = ks[N + 2]

    loss = contrast1_forward(proj_list, idx=0, pseudo_label=pseudo_label,
                             mask=mask, key=sample_key, sample_num=5)
    loss = jax.block_until_ready(loss)

    ref = contrast1_reference(proj_list, idx=0, pseudo_label=pseudo_label,
                              mask=mask, key=sample_key, sample_num=5)
    np.testing.assert_allclose(np.asarray(loss), np.asarray(ref), rtol=2e-4, atol=1e-6)
    print("KERNEL_OK")
</pallas_src>

<mosaic_0001>
module attributes {stable_mosaic.version = 11 : i64} {
  func.func @kernel(%arg0: i32, %arg1: memref<1x8x128xf32, #tpu.memory_space<vmem>>, %arg2: memref<1x2x8x128xf32, #tpu.memory_space<vmem>>, %arg3: memref<1x1x1xf32, #tpu.memory_space<vmem>>) attributes {dimension_semantics = [#tpu.dimension_semantics<parallel>], iteration_bounds = array<i64: 2>, scalar_prefetch = 0 : i64, scratch_operands = 0 : i64, tpu.core_type = #tpu.core_type<tc>, window_params = [{transform_indices = @transform_0, window_bounds = array<i64: 1, 8, 128>}, {transform_indices = @transform_1, window_bounds = array<i64: 1, 2, 8, 128>}, {transform_indices = @transform_2, window_bounds = array<i64: 1, 1, 1>}]} {
    %c0 = arith.constant 0 : index
    %c0_0 = arith.constant 0 : index
    %c0_1 = arith.constant 0 : index
    %0 = vector.load %arg1[%c0, %c0_0, %c0_1] : memref<1x8x128xf32, #tpu.memory_space<vmem>>, vector<1x8x128xf32>
    %1 = arith.mulf %0, %0 : vector<1x8x128xf32>
    %cst = arith.constant dense<0.000000e+00> : vector<1x8xf32>
    %2 = vector.multi_reduction <add>, %1, %cst [2] : vector<1x8x128xf32> to vector<1x8xf32>
    %3 = vector.shape_cast %2 : vector<1x8xf32> to vector<1x8x1xf32>
    %cst_2 = arith.constant 1.000000e-24 : f32
    %4 = vector.broadcast %cst_2 : f32 to vector<1x8x1xf32>
    %5 = arith.maximumf %3, %4 : vector<1x8x1xf32>
    %6 = math.rsqrt %5 : vector<1x8x1xf32>
    %7 = vector.broadcast %6 : vector<1x8x1xf32> to vector<1x8x128xf32>
    %8 = arith.mulf %0, %7 : vector<1x8x128xf32>
    %c0_3 = arith.constant 0 : index
    %c0_4 = arith.constant 0 : index
    %c0_5 = arith.constant 0 : index
    %c0_6 = arith.constant 0 : index
    %9 = vector.load %arg2[%c0_3, %c0_4, %c0_5, %c0_6] : memref<1x2x8x128xf32, #tpu.memory_space<vmem>>, vector<1x2x8x128xf32>
    %10 = arith.mulf %9, %9 : vector<1x2x8x128xf32>
    %cst_7 = arith.constant dense<0.000000e+00> : vector<1x2x8xf32>
    %11 = vector.multi_reduction <add>, %10, %cst_7 [3] : vector<1x2x8x128xf32> to vector<1x2x8xf32>
    %12 = vector.shape_cast %11 : vector<1x2x8xf32> to vector<1x2x8x1xf32>
    %cst_8 = arith.constant 1.000000e-24 : f32
    %13 = vector.broadcast %cst_8 : f32 to vector<1x2x8x1xf32>
    %14 = arith.maximumf %12, %13 : vector<1x2x8x1xf32>
    %15 = math.rsqrt %14 : vector<1x2x8x1xf32>
    %16 = vector.broadcast %15 : vector<1x2x8x1xf32> to vector<1x2x8x128xf32>
    %17 = arith.mulf %9, %16 : vector<1x2x8x128xf32>
    %cst_9 = arith.constant dense<0.000000e+00> : vector<1x8x128xf32>
    %18 = vector.multi_reduction <add>, %17, %cst_9 [1] : vector<1x2x8x128xf32> to vector<1x8x128xf32>
    %19 = arith.mulf %8, %18 : vector<1x8x128xf32>
    %cst_10 = arith.constant dense<0.000000e+00> : vector<1x8xf32>
    %20 = vector.multi_reduction <add>, %19, %cst_10 [2] : vector<1x8x128xf32> to vector<1x8xf32>
    %cst_11 = arith.constant 14.2857141 : f32
    %21 = vector.broadcast %cst_11 : f32 to vector<1x8xf32>
    %22 = arith.mulf %20, %21 : vector<1x8xf32>
    %23 = math.exp %22 : vector<1x8xf32>
    "tpu.trace_start"() <{level = 10 : i32, message = "bic,bjc->bij"}> : () -> ()
    %cst_12 = arith.constant dense<0.000000e+00> : vector<1x8x8xf32>
    %24 = tpu.matmul %8, %8, %cst_12 {dimension_numbers = #tpu.dot_dimension_numbers<[2], [2], [1], [1], [0, 0, 0, 1, 1, 1], [0], [0]>} : vector<1x8x128xf32>, vector<1x8x128xf32>, vector<1x8x8xf32> -> vector<1x8x8xf32>
    "tpu.trace_stop"() : () -> ()
    %cst_13 = arith.constant 14.2857141 : f32
    %25 = vector.broadcast %cst_13 : f32 to vector<1x8x8xf32>
    %26 = arith.mulf %24, %25 : vector<1x8x8xf32>
    %27 = tpu.iota {dimensions = array<i32: 0>} : vector<8x8xi32>
    %28 = tpu.iota {dimensions = array<i32: 1>} : vector<8x8xi32>
    %29 = arith.cmpi ne, %27, %28 : vector<8x8xi32>
    %c5_i32 = arith.constant 5 : i32
    %30 = vector.broadcast %c5_i32 : i32 to vector<8x8xi32>
    %31 = arith.cmpi slt, %28, %30 : vector<8x8xi32>
    %32 = arith.andi %29, %31 : vector<8x8xi1>
    %33 = vector.shape_cast %32 : vector<8x8xi1> to vector<1x8x8xi1>
    %cst_14 = arith.constant -1.000000e+30 : f32
    %34 = vector.broadcast %cst_14 : f32 to vector<1x8x8xf32>
    %35 = arith.select %33, %26, %34 : vector<1x8x8xi1>, vector<1x8x8xf32>
    %36 = math.exp %35 : vector<1x8x8xf32>
    %cst_15 = arith.constant dense<0.000000e+00> : vector<1x8xf32>
    %37 = vector.multi_reduction <add>, %36, %cst_15 [2] : vector<1x8x8xf32> to vector<1x8xf32>
    %38 = arith.addf %23, %37 : vector<1x8xf32>
    %cst_16 = arith.constant 9.99999993E-9 : f32
    %39 = vector.broadcast %cst_16 : f32 to vector<1x8xf32>
    %40 = arith.addf %38, %39 : vector<1x8xf32>
    %41 = math.log %40 : vector<1x8xf32>
    %42 = arith.subf %41, %22 : vector<1x8xf32>
    %43 = tpu.iota {dimensions = array<i32: 1>} : vector<1x8xi32>
    %c5_i32_17 = arith.constant 5 : i32
    %44 = vector.broadcast %c5_i32_17 : i32 to vector<1x8xi32>
    %45 = arith.cmpi slt, %43, %44 : vector<1x8xi32>
    %cst_18 = arith.constant 0.000000e+00 : f32
    %46 = vector.broadcast %cst_18 : f32 to vector<1x8xf32>
    %47 = arith.select %45, %42, %46 : vector<1x8xi1>, vector<1x8xf32>
    %cst_19 = arith.constant dense<0.000000e+00> : vector<1xf32>
    %48 = vector.multi_reduction <add>, %47, %cst_19 [1] : vector<1x8xf32> to vector<1xf32>
    %49 = vector.shape_cast %48 : vector<1xf32> to vector<1x1xf32>
    %cst_20 = arith.constant 2.000000e-01 : f32
    %50 = vector.broadcast %cst_20 : f32 to vector<1x1xf32>
    %51 = arith.mulf %49, %50 : vector<1x1xf32>
    %cst_21 = arith.constant dense<0.000000e+00> : vector<1xf32>
    %52 = vector.multi_reduction <add>, %51, %cst_21 [0] : vector<1x1xf32> to vector<1xf32>
    %53 = vector.shape_cast %52 : vector<1xf32> to vector<1x1xf32>
    %c0_22 = arith.constant 0 : index
    %c0_23 = arith.constant 0 : index
    %c0_24 = arith.constant 0 : index
    %54 = vector.load %arg3[%c0_22, %c0_23, %c0_24] : memref<1x1x1xf32, #tpu.memory_space<vmem>>, vector<1x1x1xf32>
    %55 = vector.shape_cast %54 : vector<1x1x1xf32> to vector<1x1xf32>
    %56 = vector.shape_cast %53 : vector<1x1xf32> to vector<1x1x1xf32>
    tpu.vector_store %arg3[%c0_22, %c0_23, %c0_24], %56 {strides = array<i32>} : memref<1x1x1xf32, #tpu.memory_space<vmem>>, vector<1x1x1xf32>,
    return
  }
  func.func @transform_0(%arg0: i32) -> (i32, i32, i32) {
    %c0_i32 = arith.constant 0 : i32
    %c0_i32_0 = arith.constant 0 : i32
    %c0_i32_1 = arith.constant 0 : i32
    return %arg0, %c0_i32, %c0_i32_0 : i32, i32, i32
  }
  func.func @transform_1(%arg0: i32) -> (i32, i32, i32, i32) {
    %c0_i32 = arith.constant 0 : i32
    %c0_i32_0 = arith.constant 0 : i32
    %c0_i32_1 = arith.constant 0 : i32
    %c0_i32_2 = arith.constant 0 : i32
    return %arg0, %c0_i32, %c0_i32_0, %c0_i32_1 : i32, i32, i32, i32
  }
  func.func @transform_2(%arg0: i32) -> (i32, i32, i32) {
    %c0_i32 = arith.constant 0 : i32
    %c0_i32_0 = arith.constant 0 : i32
    %c0_i32_1 = arith.constant 0 : i32
    return %arg0, %c0_i32, %c0_i32_0 : i32, i32, i32
  }
}

</mosaic_0001>

<llo_original>
// kernel: tpu_custom_call.1
$region0: #{tpu_custom_call.1}
  #allocation0 [shape = 'u32[]', space=smem, size = 0x4, offset = 0x4, fixed_abs, tag = 'smem constant byte address 0x4 - core index']
  #allocation1 [shape = 'u32[144,128]{1,0:T(1,128)}', space=vmem, size = 0x12000, scoped, tag = 'internal scratch']
  %s0 = inlined_call_operand.hbm [shape: f32[2,8,128], index: 0, kind: input, shape index: {}]
  %s1 = inlined_call_operand.hbm [shape: f32[2,2,8,128], index: 1, kind: input, shape index: {}]
  %s2 = inlined_call_operand.vmem [shape: f32[2,1,1], index: 2, kind: output, shape index: {}]
  %s3 = sld [smem:[#allocation0]]
  $region49: #{tpu_custom_call.1} parent=0
    _
  %s5 = ssub.s32 1, %s3
  %s6 = scalar_select 0, %s5, %s3
  $region1: #{tpu_custom_call.1} parent=0
    #allocation2 [shape = 'u8[8192]{0}', space=vmem, size = 0x2000, scoped, tag = 'input window, operand 0']
    #allocation3 [shape = 's32[2]{0}', space=sflag, size = 0x8, scoped, tag = 'scoped memory for tpu_custom_call.1']
    #allocation4 [shape = 'u8[16384]{0}', space=vmem, size = 0x4000, scoped, tag = 'input window, operand 1']
    #allocation5 [shape = 's32[2]{0}', space=sflag, size = 0x8, scoped, tag = 'scoped memory for tpu_custom_call.1']
    %7 = vsyncpa [#allocation3], 0
    %s8 = scalar_lea.sflag [#allocation3], 1
    %9 = vsyncpa %s8, 0
    %10 = vsyncpa [#allocation5], 0
    %s11 = scalar_lea.sflag [#allocation5], 1
    %12 = vsyncpa %s11, 0
    loop: start=0, step=1, limit=4
    $region2: #{tpu_custom_call.1} parent=1 // loop_pre_header
      _
    $region3: #{tpu_custom_call.1} parent=1 // loop_header
      %s14 = sphi 0, %s18
      %p15 = scmp.ge.s32.totalorder %s14, 4
      %s24 = sphi 0, %s26
      %s27 = sphi 0, %s24
      %s28 = sphi 0, %s27
      %s44 = sphi 0, %s28
      %s50 = sphi 0, %s52
      %s53 = sphi 0, %s50
      %s54 = sphi 0, %s53
      %s70 = sphi 0, %s54
      %s76 = sphi 0, %s78
      %s79 = sphi 0, %s76
      %s80 = sphi 0, %s79
      %s96 = sphi 0, %s80
    $region4: #{tpu_custom_call.1} parent=1 // loop_header_branch
      %17 = sbr.rel (%p15) target = $region8
    $region5: #{tpu_custom_call.1} parent=1 // loop_body
      %s19 = ssub.s32 %s14, 1
      %s20 = ssub.s32 %s14, 2
      %s21 = sadd.s32 %s14, 1
      %s22 = ssub.s32 %s14, %s21
      %p23 = scmp.eq.s32.totalorder %s22, 0
      %s25 = sadd.s32 %s24, 1
      %s26 = scalar_select %p23, %s24, %s25
      %p29 = pneg %p23
      %p30 = scmp.eq.s32.totalorder %s14, 1
      %p31 = por %p29, %p30
      %p32 = scmp.ne.s32.totalorder %s24, %s27
      %p33 = scmp.eq.s32.totalorder %s14, 0
      %p34 = por %p32, %p33
      %p35 = scmp.ne.s32.totalorder %s24, %s27
      %p36 = scmp.eq.s32.totalorder %s19, 1
      %p37 = por %p35, %p36
      %p38 = scmp.ne.s32.totalorder %s27, %s28
      %p39 = scmp.eq.s32.totalorder %s19, 0
      %p40 = por %p38, %p39
      %p41 = scmp.ne.s32.totalorder %s27, %s28
      %p42 = scmp.eq.s32.totalorder %s20, 1
      %p43 = por %p41, %p42
      %p45 = scmp.ne.s32.totalorder %s28, %s44
      %p46 = scmp.eq.s32.totalorder %s20, 0
      %p47 = por %p45, %p46
      %s48 = ssub.s32 %s14, %s21
      %p49 = scmp.eq.s32.totalorder %s48, 0
      %s51 = sadd.s32 %s50, 1
      %s52 = scalar_select %p49, %s50, %s51
      %p55 = pneg %p49
      %p56 = scmp.eq.s32.totalorder %s14, 1
      %p57 = por %p55, %p56
      %p58 = scmp.ne.s32.totalorder %s50, %s53
      %p59 = scmp.eq.s32.totalorder %s14, 0
      %p60 = por %p58, %p59
      %p61 = scmp.ne.s32.totalorder %s50, %s53
      %p62 = scmp.eq.s32.totalorder %s19, 1
      %p63 = por %p61, %p62
      %p64 = scmp.ne.s32.totalorder %s53, %s54
      %p65 = scmp.eq.s32.totalorder %s19, 0
      %p66 = por %p64, %p65
      %p67 = scmp.ne.s32.totalorder %s53, %s54
      %p68 = scmp.eq.s32.totalorder %s20, 1
      %p69 = por %p67, %p68
      %p71 = scmp.ne.s32.totalorder %s54, %s70
      %p72 = scmp.eq.s32.totalorder %s20, 0
      %p73 = por %p71, %p72
      %s74 = ssub.s32 %s14, %s21
      %p75 = scmp.eq.s32.totalorder %s74, 0
      %s77 = sadd.s32 %s76, 1
      %s78 = scalar_select %p75, %s76, %s77
      %p81 = pneg %p75
      %p82 = scmp.eq.s32.totalorder %s14, 1
      %p83 = por %p81, %p82
      %p84 = scmp.ne.s32.totalorder %s76, %s79
      %p85 = scmp.eq.s32.totalorder %s14, 0
      %p86 = por %p84, %p85
      %p87 = scmp.ne.s32.totalorder %s76, %s79
      %p88 = scmp.eq.s32.totalorder %s19, 1
      %p89 = por %p87, %p88
      %p90 = scmp.ne.s32.totalorder %s79, %s80
      %p91 = scmp.eq.s32.totalorder %s19, 0
      %p92 = por %p90, %p91
      %p93 = scmp.ne.s32.totalorder %s79, %s80
      %p94 = scmp.eq.s32.totalorder %s20, 1
      %p95 = por %p93, %p94
      %p97 = scmp.ne.s32.totalorder %s80, %s96
      %p98 = scmp.eq.s32.totalorder %s20, 0
      %p99 = por %p97, %p98
      %p100 = scmp.le.s32.totalorder 1, %s14
      %p101 = scmp.lt.s32.totalorder %s14, 3
      %p102 = pnand %p100, %p101
      %p103 = pneg %p102
      // Predicated region
      $region9: #{tpu_custom_call.1} parent=5 // pred_check
        _
      $region10: #{tpu_custom_call.1} parent=5 // pred_check_branch
        %105 = sbr.rel (%p102) target = $region12
      $region11: #{tpu_custom_call.1} parent=5 // pred_region
        %s106 = ssub.s32 %s14, 1
      $region12: #{tpu_custom_call.1} parent=5 // pred_fallthru
        _
      %p107 = scmp.lt.s32.totalorder %s14, 2
      // Predicated region
      $region13: #{tpu_custom_call.1} parent=5 // pred_check
        %p108 = pneg %p107
      $region14: #{tpu_custom_call.1} parent=5 // pred_check_branch
        %110 = sbr.rel (%p108) target = $region16
      $region15: #{tpu_custom_call.1} parent=5 // pred_region
        // Predicated region
        $region17: #{tpu_custom_call.1} parent=15 // pred_check
          %p111 = pneg %p34
        $region18: #{tpu_custom_call.1} parent=15 // pred_check_branch
          %113 = sbr.rel (%p111) target = $region20
        $region19: #{tpu_custom_call.1} parent=15 // pred_region
          %s114 = sand.u32 %s24, 1
          %s115 = scalar_lea.sflag [#allocation3], %s114
          %s116 = sand.u32 %s24, 1
          %s117 = smul.addr %s116, 8
          %s118 = scalar_lea.vmem [#allocation2], %s117
          %s120 = ssub.s32 128, 128
          %121 = vsyncadd %s115, %s120
          %s122 = smul.addr %s14, 128
          %s123 = scalar_lea.hbm %s0, %s122
          %s125 = sshll.u32 %s118, 4
          %s126 = int_to_ptr.vmem [resolvable:$true] %s125
          %128 = dma.hbm_to_vmem [thread:$0]  %s123, 128, %s126, %s115
        $region20: #{tpu_custom_call.1} parent=15 // pred_fallthru
          _
        // Predicated region
        $region21: #{tpu_custom_call.1} parent=15 // pred_check
          %p129 = pneg %p60
        $region22: #{tpu_custom_call.1} parent=15 // pred_check_branch
          %131 = sbr.rel (%p129) target = $region24
        $region23: #{tpu_custom_call.1} parent=15 // pred_region
          %s132 = sand.u32 %s50, 1
          %s133 = scalar_lea.sflag [#allocation5], %s132
          %s134 = sand.u32 %s50, 1
          %s135 = smul.addr %s134, 16
          %s136 = scalar_lea.vmem [#allocation4], %s135
          %s138 = ssub.s32 256, 256
          %139 = vsyncadd %s133, %s138
          %s140 = smul.addr %s14, 2
          %s141 = smul.addr %s140, 128
          %s142 = scalar_lea.hbm %s1, %s141
          %s143 = sshll.u32 %s136, 4
          %s144 = int_to_ptr.vmem [resolvable:$true] %s143
          %149 = dma.hbm_to_vmem [thread:$0]  %s142, 256, %s144, %s133, 128, 128, 8
        $region24: #{tpu_custom_call.1} parent=15 // pred_fallthru
          _
      $region16: #{tpu_custom_call.1} parent=5 // pred_fallthru
        _
      %p150 = scmp.le.s32.totalorder 1, %s14
      %p151 = scmp.lt.s32.totalorder %s14, 3
      %p152 = pnand %p150, %p151
      %p153 = pneg %p152
      // Predicated region
      $region25: #{tpu_custom_call.1} parent=5 // pred_check
        _
      $region26: #{tpu_custom_call.1} parent=5 // pred_check_branch
        %155 = sbr.rel (%p152) target = $region28
      $region27: #{tpu_custom_call.1} parent=5 // pred_region
        %s156 = ssub.s32 %s14, 1
        %s157 = sand.u32 %s27, 1
        %s158 = scalar_lea.sflag [#allocation3], %s157
        %s159 = sand.u32 %s27, 1
        %s160 = smul.addr %s159, 8
        %s161 = scalar_lea.vmem [#allocation2], %s160
        // Predicated region
        $region29: #{tpu_custom_call.1} parent=27 // pred_check
          %p162 = pneg %p40
        $region30: #{tpu_custom_call.1} parent=27 // pred_check_branch
          %164 = sbr.rel (%p162) target = $region32
        $region31: #{tpu_custom_call.1} parent=27 // pred_region
          %165 = dma.done %s158, 128
        $region32: #{tpu_custom_call.1} parent=27 // pred_fallthru
          _
        %s166 = sand.u32 %s53, 1
        %s167 = scalar_lea.sflag [#allocation5], %s166
        %s168 = sand.u32 %s53, 1
        %s169 = smul.addr %s168, 16
        %s170 = scalar_lea.vmem [#allocation4], %s169
        // Predicated region
        $region33: #{tpu_custom_call.1} parent=27 // pred_check
          %p171 = pneg %p66
        $region34: #{tpu_custom_call.1} parent=27 // pred_check_branch
          %173 = sbr.rel (%p171) target = $region36
        $region35: #{tpu_custom_call.1} parent=27 // pred_region
          %174 = dma.done %s167, 256
        $region36: #{tpu_custom_call.1} parent=27 // pred_fallthru
          _
        %s175 = sand.u32 %s27, 1
        %s176 = scalar_lea.sflag [#allocation3], %s175
        %s177 = sand.u32 %s27, 1
        %s178 = smul.addr %s177, 8
        %s179 = scalar_lea.vmem [#allocation2], %s178
        %p180 = pneg %p40
        %p181 = pneg %p37
        %s182 = sand.u32 %s53, 1
        %s183 = scalar_lea.sflag [#allocation5], %s182
        %s184 = sand.u32 %s53, 1
        %s185 = smul.addr %s184, 16
        %s186 = scalar_lea.vmem [#allocation4], %s185
        %p187 = pneg %p66
        %p188 = pneg %p63
        %p189 = pneg %p92
        %p190 = pneg %p89
        %p191 = scmp.lt.s32.totalorder %s19, 1
        %s192 = scalar_select %p191, %s19, 1
        %s193 = scalar_lea.vmem %s2, %s192
        %p194 = scmp.lt.s32.totalorder %s19, 1
        %s195 = scalar_select %p194, %s19, 1
        %s196 = scalar_lea.vmem %s2, %s195
        %v197 = vld [vmem:[%s161] sm:$0xff]
        %v198 = vmul.f32 %v197, %v197
        %199 = vadd.xlane.f32.xlu0 %v198
        %v200 = vpop.xlane.xlu0 %199
        %v201 = vmax.f32 %v200, 1e-24
        %v202 = vrsqrt.pop %v201
        %v203 = vmul.f32 %v197, %v202
        %v204 = vld [vmem:[%s170] sm:$0xff]
        %v205 = vld [vmem:[%s170 + $0x8] sm:$0xff]
        %v206 = vmul.f32 %v204, %v204
        %v207 = vmul.f32 %v205, %v205
        %208 = vadd.xlane.f32.xlu0 %v206
        %v209 = vpop.xlane.xlu0 %208
        %210 = vadd.xlane.f32.xlu0 %v207
        %v211 = vpop.xlane.xlu0 %210
        %v212 = vmax.f32 %v209, 1e-24
        %v213 = vmax.f32 %v211, 1e-24
        %v214 = vrsqrt.pop %v212
        %v215 = vrsqrt.pop %v213
        %v216 = vmul.f32 %v204, %v214
        %v217 = vmul.f32 %v205, %v215
        %v218 = vadd.f32 %v216, %v217
        %v219 = vmul.f32 %v203, %v218
        %220 = vadd.xlane.f32.xlu0 %v219
        %v221 = vpop.xlane.xlu0 %220
        %v222 = vmul.f32 %v221, 14.285714
        %v223 = vmul.f32 %v222, 1.442695
        %v224 = vpow.pop %v223
        %225 = vmatprep.subr.mxu0 0.0
        %226 = vmatpush1.xpose.msra.mxu0 %v203
        %227 = vmatprep.subr.mxu0 0.0
        %228 = vmatpush1.xpose.msra.mxu0 0.0
        %229 = vmatprep.subr.mxu0 0.0
        %230 = vmatpush1.xpose.msra.mxu0 0.0
        %231 = vmatprep.subr.mxu0 0.0
        %232 = vmatpush1.xpose.msra.mxu0 0.0
        %233 = vmatprep.subr.mxu0 0.0
        %234 = vmatpush1.xpose.msra.mxu0 0.0
        %235 = vmatprep.subr.mxu0 0.0
        %236 = vmatpush1.xpose.msra.mxu0 0.0
        %237 = vmatprep.subr.mxu0 0.0
        %238 = vmatpush1.xpose.msra.mxu0 0.0
        %239 = vmatprep.subr.mxu0 0.0
        %240 = vmatpush1.xpose.msra.mxu0 0.0
        %241 = vmatprep.subr.mxu0 0.0
        %242 = vmatpush1.xpose.msra.mxu0 0.0
        %243 = vmatprep.subr.mxu0 0.0
        %244 = vmatpush1.xpose.msra.mxu0 0.0
        %245 = vmatprep.subr.mxu0 0.0
        %246 = vmatpush1.xpose.msra.mxu0 0.0
        %247 = vmatprep.subr.mxu0 0.0
        %248 = vmatpush1.xpose.msra.mxu0 0.0
        %249 = vmatprep.subr.mxu0 0.0
        %250 = vmatpush1.xpose.msra.mxu0 0.0
        %251 = vmatprep.subr.mxu0 0.0
        %252 = vmatpush1.xpose.msra.mxu0 0.0
        %253 = vmatprep.subr.mxu0 0.0
        %254 = vmatpush1.xpose.msra.mxu0 0.0
        %255 = vmatprep.subr.mxu0 0.0
        %256 = vmatpush1.xpose.msra.mxu0 0.0
        %257 = vmatprep.subr.mxu0 0.0
        %258 = vmatpush1.xpose.msra.mxu0 0.0
        %259 = vmatprep.subr.mxu0 0.0
        %260 = vmatpush1.xpose.msra.mxu0 0.0
        %261 = vmatprep.subr.mxu0 0.0
        %262 = vmatpush1.xpose.msra.mxu0 0.0
        %263 = vmatprep.subr.mxu0 0.0
        %264 = vmatpush1.xpose.msra.mxu0 0.0
        %265 = vmatprep.subr.mxu0 0.0
        %266 = vmatpush1.xpose.msra.mxu0 0.0
        %267 = vmatprep.subr.mxu0 0.0
        %268 = vmatpush1.xpose.msra.mxu0 0.0
        %269 = vmatprep.subr.mxu0 0.0
        %270 = vmatpush1.xpose.msra.mxu0 0.0
        %271 = vmatprep.subr.mxu0 0.0
        %272 = vmatpush1.xpose.msra.mxu0 0.0
        %273 = vmatprep.subr.mxu0 0.0
        %274 = vmatpush1.xpose.msra.mxu0 0.0
        %275 = vmatprep.subr.mxu0 0.0
        %276 = vmatpush1.xpose.msra.mxu0 0.0
        %277 = vmatprep.subr.mxu0 0.0
        %278 = vmatpush1.xpose.msra.mxu0 0.0
        %279 = vmatprep.subr.mxu0 0.0
        %280 = vmatpush1.xpose.msra.mxu0 0.0
        %281 = vmatprep.subr.mxu0 0.0
        %282 = vmatpush1.xpose.msra.mxu0 0.0
        %283 = vmatprep.subr.mxu0 0.0
        %284 = vmatpush1.xpose.msra.mxu0 0.0
        %285 = vmatprep.subr.mxu0 0.0
        %286 = vmatpush1.xpose.msra.mxu0 0.0
        %287 = vmatprep.subr.mxu0 0.0
        %288 = vmatpush1.xpose.msra.mxu0 0.0
        %289 = vmatprep.mubr.f32.mxu0 0.0
        %290 = vmatmul.mubr.f32.gmra.mrb[0].mxu0 %v203
        %v291 = vpop.f32.mrb[0].mxu0
        %v292 = vadd.f32 0.0, %v291
        %v293 = vpop.f32.mrb[0].mxu0
        %294 = vdwg.mxu0
        %v295 = vmul.f32 %v292, 14.285714
        %v296 = vlaneseq
        %v297 = vshrl.u32 %v296, 7
        %v298 = vlaneseq
        %v299 = vand.u32 %v298, 127
        %vm300 = vcmp.ne.s32.totalorder %v297, %v299
        %vm301 = vcmp.lt.s32.totalorder %v299, 5
        %vm302 = vmand %vm300, %vm301
        %v303 = vsel %vm302, %v295, -1e+30
        %v304 = vmul.f32 %v303, 1.442695
        %v305 = vpow.pop %v304
        %vm306 = vcmask 64512
        %v307 = vsel %vm306, %v305, 0.0
        %308 = vadd.xlane.f32.xlu0 %v307
        %v309 = vpop.xlane.xlu0 %308
        %v310 = vadd.f32 %v224, %v309
        %v311 = vadd.f32 %v310, 1e-08
        %v312 = vlog2.pop %v311
        %v313 = vmul.f32 %v312, 0.6931472
        %v314 = vsub.f32 %v313, %v222
        %v316 = vlaneseq
        %v317 = vshrl.u32 %v316, 7
        %v318 = vsub.s32 %v299, %v317
        %v319 = vrot.slane %v314, %v318
        %v321 = vsel %vm301, %v319, 0.0
        %vm322 = vcmask 57344
        %v323 = vsel %vm322, %v321, 0.0
        %324 = vadd.xlane.f32.xlu0 %v323
        %v325 = vpop.xlane.xlu0 %324
        %v326 = vmul.f32 %v325, 0.2
        %v327 = vadd.f32 %v326, 0.0
        %vm328 = vcmask 0
        %329 = vst.msk [vmem:[%s196] sm:$0x1] %vm328, %v327
        %p330 = scmp.lt.s32.totalorder %s19, 1
        %s331 = scalar_select %p330, %s19, 1
        %s332 = scalar_lea.vmem %s2, %s331
        // Predicated region
        $region37: #{tpu_custom_call.1} parent=27 // pred_check
          %p333 = pneg %p89
        $region38: #{tpu_custom_call.1} parent=27 // pred_check_branch
          %335 = sbr.rel (%p333) target = $region40
        $region39: #{tpu_custom_call.1} parent=27 // pred_region
          _
        $region40: #{tpu_custom_call.1} parent=27 // pred_fallthru
          _
      $region28: #{tpu_custom_call.1} parent=5 // pred_fallthru
        _
      %p336 = scmp.le.s32.totalorder 2, %s14
      // Predicated region
      $region41: #{tpu_custom_call.1} parent=5 // pred_check
        %p337 = pneg %p336
      $region42: #{tpu_custom_call.1} parent=5 // pred_check_branch
        %339 = sbr.rel (%p337) target = $region44
      $region43: #{tpu_custom_call.1} parent=5 // pred_region
        %s340 = ssub.s32 %s14, 2
        // Predicated region
        $region45: #{tpu_custom_call.1} parent=43 // pred_check
          %p341 = pneg %p95
        $region46: #{tpu_custom_call.1} parent=43 // pred_check_branch
          %343 = sbr.rel (%p341) target = $region48
        $region47: #{tpu_custom_call.1} parent=43 // pred_region
          %p344 = scmp.lt.s32.totalorder %s20, 1
          %s345 = scalar_select %p344, %s20, 1
          %s346 = scalar_lea.vmem %s2, %s345
        $region48: #{tpu_custom_call.1} parent=43 // pred_fallthru
          _
      $region44: #{tpu_custom_call.1} parent=5 // pred_fallthru
        _
    $region6: #{tpu_custom_call.1} parent=1 // loop_footer
      %s18 = sadd.s32 1, %s14
    $region7: #{tpu_custom_call.1} parent=1 // loop_footer_branch
      %13 = sbr.rel target = $region3
    $region8: #{tpu_custom_call.1} parent=1 // loop_exit
      _
    %347 = vsyncpa [#allocation3], 1
    %s348 = scalar_lea.sflag [#allocation3], 1
    %349 = vsyncpa %s348, 1
    %350 = vsyncpa [#allocation5], 1
    %s351 = scalar_lea.sflag [#allocation5], 1
    %352 = vsyncpa %s351, 1

</llo_original>
